<compile_context>
chip_gen: v6e
topology: v6e:2x2x1
jax: 0.10.0
libtpu: 0.0.40
codegen_flags: <defaults>
</compile_context>

<pallas_src>
import jax
import jax.numpy as jnp
from jax import lax
from jax.experimental import pallas as pl
from jax.experimental.pallas import tpu as pltpu


def glad_score_kernel(h_ref, umask_ref, acts_ref, amask_ref, cutt_ref,
                      vals_ref, w_ref, params_ref, out_ref):
    # Per grid step (one tile of the ontology-value axis):
    #   h_ref     : (B, T, D)    bf16   utterance encoding H_utt
    #   umask_ref : (B, T)       f32    1 = valid utterance token
    #   acts_ref  : (B, A, D)    bf16   system-act encodings
    #   amask_ref : (B, A)       f32    1 = valid act
    #   cutt_ref  : (B, D)       bf16   utterance summary c_utt
    #   vals_ref  : (TV, D)      bf16   this tile of ontology value encodings
    #   w_ref     : (1, D)       bf16   utt_scorer weight
    #   params_ref: (1, 2)       f32    [bias, score_weight] in SMEM
    #   out_ref   : (B, TV)      f32    lane-dense output tile
    B, T, D = h_ref.shape
    TV = vals_ref.shape[0]
    BIG = jnp.float32(1e30)

    bias = params_ref[0, 0]
    sw = params_ref[0, 1]

    H = h_ref[...]                                   # bf16, fed straight to MXU
    Vv = vals_ref[...]                               # bf16
    umask = umask_ref[...]                           # f32

    # ---- attend(H_utt, c_val) for every value in this tile -------------------
    # Fold batch into the matmul M dim: one (B*T, D) x (D, TV) bf16 MXU dot
    # with f32 accumulation (instead of a B-batched einsum).
    H2d = H.reshape(B * T, D)
    s_u = lax.dot_general(H2d, Vv, (((1,), (1,)), ((), ())),
                          preferred_element_type=jnp.float32)        # (B*T, TV)
    s_u = s_u.reshape(B, T, TV)
    # Finite additive mask: fully-masked rows give a uniform softmax, not NaN.
    s_u = s_u + (umask[:, :, None] - 1.0) * BIG
    m_u = jnp.max(s_u, axis=1, keepdims=True)                        # (B, 1, TV)
    e_u = jnp.exp(s_u - m_u)
    p_u = e_u * pl.reciprocal(jnp.sum(e_u, axis=1, keepdims=True),
                              approx=False)                          # (B, T, TV)

    # utt_scorer folded through the attention weights (no (B, V, D) q_utt):
    #   y_utts[b, v] = sum_t p_u[b, t, v] * (H[b, t, :] @ w) + bias
    w32 = w_ref[...].astype(jnp.float32)                             # (1, D)
    Hw = jnp.sum(H.astype(jnp.float32) * w32[None], axis=-1,
                 keepdims=True)                                      # (B, T, 1)
    y_utts = jnp.sum(p_u * Hw, axis=1) + bias                        # (B, TV)

    # ---- attend(C_acts, c_utt) per example (V-independent, tiny at A~6) ------
    # TODO(synk): move this onto the MXU (batched dot) if A/B are scaled up;
    # at A=6 it is negligible VPU/XLU filler around the main matmul.
    A32 = acts_ref[...].astype(jnp.float32)                          # (B, A, D)
    c32 = cutt_ref[...].astype(jnp.float32)                          # (B, D)
    amask = amask_ref[...]                                           # (B, A)
    s_a = jnp.sum(c32[:, None, :] * A32, axis=-1)                    # (B, A)
    s_a = s_a + (amask - 1.0) * BIG
    m_a = jnp.max(s_a, axis=1, keepdims=True)
    e_a = jnp.exp(s_a - m_a)
    p_a = e_a * pl.reciprocal(jnp.sum(e_a, axis=1, keepdims=True),
                              approx=False)                          # (B, A)
    q_act = jnp.sum(p_a[:, :, None] * A32, axis=1)                   # (B, D) f32

    # ---- y_acts = q_act @ C_vals^T for this value tile ------------------------
    y_acts = jnp.einsum('bd,vd->bv', q_act, Vv.astype(jnp.float32),
                        preferred_element_type=jnp.float32)          # (B, TV)

    logits = y_utts + sw * y_acts
    out_ref[...] = pl.reciprocal(1.0 + jnp.exp(-logits),
                                 approx=False).astype(out_ref.dtype)


def glad_slot_scores(H_utt, utt_mask, C_acts, act_mask, c_utt, C_vals,
                     w_scorer, bias, score_weight, *, v_tile=128):
    """Fused per-slot GLAD scoring. v_tile: 128 (v5e) / 256 (v6e, v7x)."""
    B, T, D = H_utt.shape
    A = C_acts.shape[1]
    V = C_vals.shape[0]

    # Lane-dense ontology-value axis: pad V to a multiple of the tile so the
    # output store is an unmasked lane-dense vst and V can be gridded with
    # parallel semantics (both v7x TensorCores busy). Padding is sliced off.
    n_vt = pl.cdiv(V, v_tile)
    V_pad = n_vt * v_tile
    if V_pad != V:
        C_vals = jnp.pad(C_vals, ((0, V_pad - V), (0, 0)))

    # bias + score_weight merged into one small SMEM block.
    params = jnp.array([[bias, score_weight]], jnp.float32)          # (1, 2)

    out = pl.pallas_call(
        glad_score_kernel,
        out_shape=jax.ShapeDtypeStruct((B, V_pad), jnp.float32),
        grid_spec=pltpu.PrefetchScalarGridSpec(
            num_scalar_prefetch=0,
            grid=(n_vt,),
            in_specs=[
                pl.BlockSpec((B, T, D), lambda v: (0, 0, 0)),        # H_utt
                pl.BlockSpec((B, T), lambda v: (0, 0)),              # utt_mask
                pl.BlockSpec((B, A, D), lambda v: (0, 0, 0)),        # C_acts
                pl.BlockSpec((B, A), lambda v: (0, 0)),              # act_mask
                pl.BlockSpec((B, D), lambda v: (0, 0)),              # c_utt
                pl.BlockSpec((v_tile, D), lambda v: (v, 0)),         # C_vals tile
                pl.BlockSpec((1, D), lambda v: (0, 0)),              # w_scorer
                pl.BlockSpec((1, 2), lambda v: (0, 0),
                             memory_space=pltpu.MemorySpace.SMEM),   # [bias, sw]
            ],
            out_specs=pl.BlockSpec((B, v_tile), lambda v: (0, v)),
        ),
        compiler_params=pltpu.CompilerParams(
            dimension_semantics=("parallel",),
            vmem_limit_bytes=32 * 1024 * 1024),
    )(H_utt, utt_mask, C_acts, act_mask, c_utt, C_vals, w_scorer, params)
    return out[:, :V]


def reference(H_utt, utt_lens, C_acts, act_lens, c_utt, C_vals,
              w_scorer, bias, score_weight):
    """Pure-JAX (f32) re-implementation of the same per-slot scoring."""
    H = H_utt.astype(jnp.float32)
    A = C_acts.astype(jnp.float32)
    cu = c_utt.astype(jnp.float32)
    Vv = C_vals.astype(jnp.float32)
    w = w_scorer.astype(jnp.float32)
    B, T, D = H.shape
    Am = A.shape[1]
    tmask = jnp.arange(T)[None, :] < utt_lens[:, None]
    amask = jnp.arange(Am)[None, :] < act_lens[:, None]

    s_u = jnp.einsum('btd,vd->btv', H, Vv)
    s_u = jnp.where(tmask[:, :, None], s_u, -jnp.inf)
    p_u = jax.nn.softmax(s_u, axis=1)
    q_utt = jnp.einsum('btv,btd->bvd', p_u, H)
    y_utts = jnp.einsum('bvd,d->bv', q_utt, w[0]) + bias

    s_a = jnp.sum(cu[:, None, :] * A, axis=-1)
    s_a = jnp.where(amask, s_a, -jnp.inf)
    p_a = jax.nn.softmax(s_a, axis=1)
    q_act = jnp.einsum('ba,bad->bd', p_a, A)
    y_acts = q_act @ Vv.T

    return jax.nn.sigmoid(y_utts + score_weight * y_acts)


if __name__ == "__main__":
    # TODO(synk): the ELMo embedder and the recurrent GLADEncoder internals
    # (run_rnn pack_padded bi-LSTMs + SelfAttention + beta mixing) are external
    # modules with no clean single-kernel Pallas equivalent; their outputs
    # (H_utt, c_utt, C_acts, C_vals) are synthesized deterministically here
    # and fed to the fused per-slot scoring kernel.
    B, T, D, V, A = 2, 8, 128, 8, 6   # batch, utt tokens, 2*dhid, values, acts
    key = jax.random.PRNGKey(0)
    ks = jax.random.split(key, 6)

    # bf16 encoder outputs / weights (MXU-native operand dtype on v6e/v7x).
    H_utt = jax.random.normal(ks[0], (B, T, D), jnp.float32).astype(jnp.bfloat16)
    c_utt = jax.random.normal(ks[1], (B, D), jnp.float32).astype(jnp.bfloat16)
    C_acts = jax.random.normal(ks[2], (B, A, D), jnp.float32).astype(jnp.bfloat16)
    C_vals = jax.random.normal(ks[3], (V, D), jnp.float32).astype(jnp.bfloat16)
    w_scorer = (0.1 * jax.random.normal(ks[4], (1, D), jnp.float32)).astype(jnp.bfloat16)
    bias = 0.01
    score_weight = 0.5

    # variable lengths (utterance tokens / number of system acts per example)
    utt_lens = jnp.array([T, 5], jnp.int32)
    act_lens = jnp.array([A, 3], jnp.int32)
    utt_mask = (jnp.arange(T)[None, :] < utt_lens[:, None]).astype(jnp.float32)
    act_mask = (jnp.arange(A)[None, :] < act_lens[:, None]).astype(jnp.float32)

    out = glad_slot_scores(H_utt, utt_mask, C_acts, act_mask, c_utt, C_vals,
                           w_scorer, bias, score_weight)
    out = jax.block_until_ready(out)

    ref = reference(H_utt, utt_lens, C_acts, act_lens, c_utt, C_vals,
                    w_scorer, bias, score_weight)
    assert out.shape == (B, V)
    assert bool(jnp.all(jnp.isfinite(out)))
    assert jnp.allclose(out, ref, atol=1e-4, rtol=1e-4), (out, ref)
    print("KERNEL_OK")
</pallas_src>

<mosaic_0001>
module attributes {stable_mosaic.version = 11 : i64} {
  func.func @glad_score_kernel(%arg0: i32, %arg1: memref<2x8x128xbf16, #tpu.memory_space<vmem>>, %arg2: memref<2x8xf32, #tpu.memory_space<vmem>>, %arg3: memref<2x6x128xbf16, #tpu.memory_space<vmem>>, %arg4: memref<2x6xf32, #tpu.memory_space<vmem>>, %arg5: memref<2x128xbf16, #tpu.memory_space<vmem>>, %arg6: memref<128x128xbf16, #tpu.memory_space<vmem>>, %arg7: memref<1x128xbf16, #tpu.memory_space<vmem>>, %arg8: memref<1x2xf32, #tpu.memory_space<smem>>, %arg9: memref<2x128xf32, #tpu.memory_space<vmem>>) attributes {dimension_semantics = [#tpu.dimension_semantics<parallel>], iteration_bounds = array<i64: 1>, scalar_prefetch = 0 : i64, scratch_operands = 0 : i64, tpu.core_type = #tpu.core_type<tc>, window_params = [{pipeline_mode = #tpu.pipeline_mode<synchronous>, transform_indices = @transform_0, window_bounds = array<i64: 2, 8, 128>}, {pipeline_mode = #tpu.pipeline_mode<synchronous>, transform_indices = @transform_1, window_bounds = array<i64: 2, 8>}, {pipeline_mode = #tpu.pipeline_mode<synchronous>, transform_indices = @transform_2, window_bounds = array<i64: 2, 6, 128>}, {pipeline_mode = #tpu.pipeline_mode<synchronous>, transform_indices = @transform_3, window_bounds = array<i64: 2, 6>}, {pipeline_mode = #tpu.pipeline_mode<synchronous>, transform_indices = @transform_4, window_bounds = array<i64: 2, 128>}, {transform_indices = @transform_5, window_bounds = array<i64: 128, 128>}, {pipeline_mode = #tpu.pipeline_mode<synchronous>, transform_indices = @transform_6, window_bounds = array<i64: 1, 128>}, {transform_indices = @transform_7, window_bounds = array<i64: 1, 2>}, {transform_indices = @transform_8, window_bounds = array<i64: 2, 128>}]} {
    %c0 = arith.constant 0 : index
    %c0_0 = arith.constant 0 : index
    %0 = memref.load %arg8[%c0, %c0_0] : memref<1x2xf32, #tpu.memory_space<smem>>
    %c0_1 = arith.constant 0 : index
    %c1 = arith.constant 1 : index
    %1 = memref.load %arg8[%c0_1, %c1] : memref<1x2xf32, #tpu.memory_space<smem>>
    %c0_2 = arith.constant 0 : index
    %c0_3 = arith.constant 0 : index
    %c0_4 = arith.constant 0 : index
    %2 = vector.load %arg1[%c0_2, %c0_3, %c0_4] : memref<2x8x128xbf16, #tpu.memory_space<vmem>>, vector<2x8x128xbf16>
    %c0_5 = arith.constant 0 : index
    %c0_6 = arith.constant 0 : index
    %3 = vector.load %arg6[%c0_5, %c0_6] : memref<128x128xbf16, #tpu.memory_space<vmem>>, vector<128x128xbf16>
    %c0_7 = arith.constant 0 : index
    %c0_8 = arith.constant 0 : index
    %4 = vector.load %arg2[%c0_7, %c0_8] : memref<2x8xf32, #tpu.memory_space<vmem>>, vector<2x8xf32>
    %5 = vector.shape_cast %2 : vector<2x8x128xbf16> to vector<16x128xbf16>
    %cst = arith.constant dense<0.000000e+00> : vector<16x128xf32>
    %6 = tpu.matmul %5, %3, %cst {dimension_numbers = #tpu.dot_dimension_numbers<[1], [1], [0], [0], [0, 0, 1, 0], [], []>} : vector<16x128xbf16>, vector<128x128xbf16>, vector<16x128xf32> -> vector<16x128xf32>
    %7 = vector.shape_cast %6 : vector<16x128xf32> to vector<2x8x128xf32>
    %8 = vector.shape_cast %4 : vector<2x8xf32> to vector<2x8x1xf32>
    %cst_9 = arith.constant 1.000000e+00 : f32
    %9 = vector.broadcast %cst_9 : f32 to vector<2x8x1xf32>
    %10 = arith.subf %8, %9 : vector<2x8x1xf32>
    %cst_10 = arith.constant 1.000000e+30 : f32
    %11 = vector.broadcast %cst_10 : f32 to vector<2x8x1xf32>
    %12 = arith.mulf %10, %11 : vector<2x8x1xf32>
    %13 = vector.broadcast %12 : vector<2x8x1xf32> to vector<2x8x128xf32>
    %14 = arith.addf %7, %13 : vector<2x8x128xf32>
    %cst_11 = arith.constant dense<0xFF800000> : vector<2x128xf32>
    %15 = vector.multi_reduction <maximumf>, %14, %cst_11 [1] : vector<2x8x128xf32> to vector<2x128xf32>
    %16 = vector.shape_cast %15 : vector<2x128xf32> to vector<2x1x128xf32>
    %17 = vector.broadcast %16 : vector<2x1x128xf32> to vector<2x8x128xf32>
    %18 = arith.subf %14, %17 : vector<2x8x128xf32>
    %19 = math.exp %18 : vector<2x8x128xf32>
    %cst_12 = arith.constant dense<0.000000e+00> : vector<2x128xf32>
    %20 = vector.multi_reduction <add>, %19, %cst_12 [1] : vector<2x8x128xf32> to vector<2x128xf32>
    %21 = vector.shape_cast %20 : vector<2x128xf32> to vector<2x1x128xf32>
    %22 = tpu.reciprocal %21 : vector<2x1x128xf32> -> vector<2x1x128xf32>
    %23 = vector.broadcast %22 : vector<2x1x128xf32> to vector<2x8x128xf32>
    %24 = arith.mulf %19, %23 : vector<2x8x128xf32>
    %c0_13 = arith.constant 0 : index
    %c0_14 = arith.constant 0 : index
    %25 = vector.load %arg7[%c0_13, %c0_14] : memref<1x128xbf16, #tpu.memory_space<vmem>>, vector<1x128xbf16>
    %26 = arith.extf %25 : vector<1x128xbf16> to vector<1x128xf32>
    %27 = arith.extf %2 : vector<2x8x128xbf16> to vector<2x8x128xf32>
    %28 = vector.shape_cast %26 : vector<1x128xf32> to vector<1x1x128xf32>
    %29 = vector.broadcast %28 : vector<1x1x128xf32> to vector<2x8x128xf32>
    %30 = arith.mulf %27, %29 : vector<2x8x128xf32>
    %cst_15 = arith.constant dense<0.000000e+00> : vector<2x8xf32>
    %31 = vector.multi_reduction <add>, %30, %cst_15 [2] : vector<2x8x128xf32> to vector<2x8xf32>
    %32 = vector.shape_cast %31 : vector<2x8xf32> to vector<2x8x1xf32>
    %33 = vector.broadcast %32 : vector<2x8x1xf32> to vector<2x8x128xf32>
    %34 = arith.mulf %24, %33 : vector<2x8x128xf32>
    %cst_16 = arith.constant dense<0.000000e+00> : vector<2x128xf32>
    %35 = vector.multi_reduction <add>, %34, %cst_16 [1] : vector<2x8x128xf32> to vector<2x128xf32>
    %36 = vector.broadcast %0 : f32 to vector<2x128xf32>
    %37 = arith.addf %35, %36 : vector<2x128xf32>
    %c0_17 = arith.constant 0 : index
    %c0_18 = arith.constant 0 : index
    %c0_19 = arith.constant 0 : index
    %38 = vector.load %arg3[%c0_17, %c0_18, %c0_19] : memref<2x6x128xbf16, #tpu.memory_space<vmem>>, vector<2x6x128xbf16>
    %39 = arith.extf %38 : vector<2x6x128xbf16> to vector<2x6x128xf32>
    %c0_20 = arith.constant 0 : index
    %c0_21 = arith.constant 0 : index
    %40 = vector.load %arg5[%c0_20, %c0_21] : memref<2x128xbf16, #tpu.memory_space<vmem>>, vector<2x128xbf16>
    %41 = arith.extf %40 : vector<2x128xbf16> to vector<2x128xf32>
    %c0_22 = arith.constant 0 : index
    %c0_23 = arith.constant 0 : index
    %42 = vector.load %arg4[%c0_22, %c0_23] : memref<2x6xf32, #tpu.memory_space<vmem>>, vector<2x6xf32>
    %43 = vector.shape_cast %41 : vector<2x128xf32> to vector<2x1x128xf32>
    %44 = vector.broadcast %43 : vector<2x1x128xf32> to vector<2x6x128xf32>
    %45 = arith.mulf %44, %39 : vector<2x6x128xf32>
    %cst_24 = arith.constant dense<0.000000e+00> : vector<2x6xf32>
    %46 = vector.multi_reduction <add>, %45, %cst_24 [2] : vector<2x6x128xf32> to vector<2x6xf32>
    %cst_25 = arith.constant 1.000000e+00 : f32
    %47 = vector.broadcast %cst_25 : f32 to vector<2x6xf32>
    %48 = arith.subf %42, %47 : vector<2x6xf32>
    %cst_26 = arith.constant 1.000000e+30 : f32
    %49 = vector.broadcast %cst_26 : f32 to vector<2x6xf32>
    %50 = arith.mulf %48, %49 : vector<2x6xf32>
    %51 = arith.addf %46, %50 : vector<2x6xf32>
    %cst_27 = arith.constant dense<0xFF800000> : vector<2xf32>
    %52 = vector.multi_reduction <maximumf>, %51, %cst_27 [1] : vector<2x6xf32> to vector<2xf32>
    %53 = vector.shape_cast %52 : vector<2xf32> to vector<2x1xf32>
    %54 = vector.broadcast %53 : vector<2x1xf32> to vector<2x6xf32>
    %55 = arith.subf %51, %54 : vector<2x6xf32>
    %56 = math.exp %55 : vector<2x6xf32>
    %cst_28 = arith.constant dense<0.000000e+00> : vector<2xf32>
    %57 = vector.multi_reduction <add>, %56, %cst_28 [1] : vector<2x6xf32> to vector<2xf32>
    %58 = vector.shape_cast %57 : vector<2xf32> to vector<2x1xf32>
    %59 = tpu.reciprocal %58 : vector<2x1xf32> -> vector<2x1xf32>
    %60 = vector.broadcast %59 : vector<2x1xf32> to vector<2x6xf32>
    %61 = arith.mulf %56, %60 : vector<2x6xf32>
    %62 = vector.shape_cast %61 : vector<2x6xf32> to vector<2x6x1xf32>
    %63 = vector.broadcast %62 : vector<2x6x1xf32> to vector<2x6x128xf32>
    %64 = arith.mulf %63, %39 : vector<2x6x128xf32>
    %cst_29 = arith.constant dense<0.000000e+00> : vector<2x128xf32>
    %65 = vector.multi_reduction <add>, %64, %cst_29 [1] : vector<2x6x128xf32> to vector<2x128xf32>
    %66 = arith.extf %3 : vector<128x128xbf16> to vector<128x128xf32>
    "tpu.trace_start"() <{level = 10 : i32, message = "bd,vd->bv"}> : () -> ()
    %cst_30 = arith.constant dense<0.000000e+00> : vector<2x128xf32>
    %67 = tpu.matmul %65, %66, %cst_30 {dimension_numbers = #tpu.dot_dimension_numbers<[1], [1], [0], [0], [0, 0, 1, 0], [], []>} : vector<2x128xf32>, vector<128x128xf32>, vector<2x128xf32> -> vector<2x128xf32>
    "tpu.trace_stop"() : () -> ()
    %68 = vector.broadcast %1 : f32 to vector<2x128xf32>
    %69 = arith.mulf %68, %67 : vector<2x128xf32>
    %70 = arith.addf %37, %69 : vector<2x128xf32>
    %cst_31 = arith.constant 0.000000e+00 : f32
    %71 = vector.broadcast %cst_31 : f32 to vector<2x128xf32>
    %72 = arith.subf %71, %70 : vector<2x128xf32>
    %73 = math.exp %72 : vector<2x128xf32>
    %cst_32 = arith.constant 1.000000e+00 : f32
    %74 = vector.broadcast %cst_32 : f32 to vector<2x128xf32>
    %75 = arith.addf %74, %73 : vector<2x128xf32>
    %76 = tpu.reciprocal %75 : vector<2x128xf32> -> vector<2x128xf32>
    %c0_33 = arith.constant 0 : index
    %c0_34 = arith.constant 0 : index
    %77 = vector.load %arg9[%c0_33, %c0_34] : memref<2x128xf32, #tpu.memory_space<vmem>>, vector<2x128xf32>
    tpu.vector_store %arg9[%c0_33, %c0_34], %76 {strides = array<i32>} : memref<2x128xf32, #tpu.memory_space<vmem>>, vector<2x128xf32>,
    return
  }
  func.func @transform_0(%arg0: i32) -> (i32, i32, i32) {
    %c0_i32 = arith.constant 0 : i32
    %c0_i32_0 = arith.constant 0 : i32
    %c0_i32_1 = arith.constant 0 : i32
    %c0_i32_2 = arith.constant 0 : i32
    return %c0_i32, %c0_i32_0, %c0_i32_1 : i32, i32, i32
  }
  func.func @transform_1(%arg0: i32) -> (i32, i32) {
    %c0_i32 = arith.constant 0 : i32
    %c0_i32_0 = arith.constant 0 : i32
    %c0_i32_1 = arith.constant 0 : i32
    return %c0_i32, %c0_i32_0 : i32, i32
  }
  func.func @transform_2(%arg0: i32) -> (i32, i32, i32) {
    %c0_i32 = arith.constant 0 : i32
    %c0_i32_0 = arith.constant 0 : i32
    %c0_i32_1 = arith.constant 0 : i32
    %c0_i32_2 = arith.constant 0 : i32
    return %c0_i32, %c0_i32_0, %c0_i32_1 : i32, i32, i32
  }
  func.func @transform_3(%arg0: i32) -> (i32, i32) {
    %c0_i32 = arith.constant 0 : i32
    %c0_i32_0 = arith.constant 0 : i32
    %c0_i32_1 = arith.constant 0 : i32
    return %c0_i32, %c0_i32_0 : i32, i32
  }
  func.func @transform_4(%arg0: i32) -> (i32, i32) {
    %c0_i32 = arith.constant 0 : i32
    %c0_i32_0 = arith.constant 0 : i32
    %c0_i32_1 = arith.constant 0 : i32
    return %c0_i32, %c0_i32_0 : i32, i32
  }
  func.func @transform_5(%arg0: i32) -> (i32, i32) {
    %c0_i32 = arith.constant 0 : i32
    %c0_i32_0 = arith.constant 0 : i32
    return %arg0, %c0_i32 : i32, i32
  }
  func.func @transform_6(%arg0: i32) -> (i32, i32) {
    %c0_i32 = arith.constant 0 : i32
    %c0_i32_0 = arith.constant 0 : i32
    %c0_i32_1 = arith.constant 0 : i32
    return %c0_i32, %c0_i32_0 : i32, i32
  }
  func.func @transform_7(%arg0: i32) -> (i32, i32) {
    %c0_i32 = arith.constant 0 : i32
    %c0_i32_0 = arith.constant 0 : i32
    %c0_i32_1 = arith.constant 0 : i32
    return %c0_i32, %c0_i32_0 : i32, i32
  }
  func.func @transform_8(%arg0: i32) -> (i32, i32) {
    %c0_i32 = arith.constant 0 : i32
    %c0_i32_0 = arith.constant 0 : i32
    return %c0_i32, %arg0 : i32, i32
  }
}

</mosaic_0001>

<llo_original>
// kernel: tpu_custom_call.1
$region0: #{tpu_custom_call.1}
  #allocation0 [shape = 'u32[]', space=smem, size = 0x4, offset = 0x4, fixed_abs, tag = 'smem constant byte address 0x4 - core index']
  #allocation1 [shape = 'u32[144,128]{1,0:T(1,128)}', space=vmem, size = 0x12000, scoped, tag = 'internal scratch']
  %s0 = inlined_call_operand.vmem [shape: bf16[2,8,128], index: 0, kind: input, shape index: {}]
  %s1 = inlined_call_operand.vmem [shape: f32[2,8], index: 1, kind: input, shape index: {}]
  %s2 = inlined_call_operand.vmem [shape: bf16[2,6,128], index: 2, kind: input, shape index: {}]
  %s3 = inlined_call_operand.vmem [shape: f32[2,6], index: 3, kind: input, shape index: {}]
  %s4 = inlined_call_operand.vmem [shape: bf16[2,128], index: 4, kind: input, shape index: {}]
  %s5 = inlined_call_operand.hbm [shape: bf16[128,128], index: 5, kind: input, shape index: {}]
  %s6 = inlined_call_operand.vmem [shape: bf16[1,128], index: 6, kind: input, shape index: {}]
  %s7 = inlined_call_operand.vmem [shape: f32[1,2], index: 7, kind: input, shape index: {}]
  %s8 = inlined_call_operand.hbm [shape: f32[2,128], index: 8, kind: output, shape index: {}]
  %s9 = sld [smem:[#allocation0]]
  $region50: #{tpu_custom_call.1} parent=0
    _
  %s11 = ssub.s32 1, %s9
  %s12 = scalar_select 0, %s11, %s9
  $region1: #{tpu_custom_call.1} parent=0
    #allocation2 [shape = 'u8[32768]{0}', space=vmem, size = 0x8000, scoped, tag = 'input window, operand 5, single buffered']
    #allocation3 [shape = 's32[1]{0}', space=sflag, size = 0x4, scoped, tag = 'scoped memory for tpu_custom_call.1']
    #allocation4 [shape = 's32[1]{0}', space=sflag, size = 0x4, scoped, tag = 'scoped memory for tpu_custom_call.1']
    #allocation5 [shape = 's32[1]{0}', space=sflag, size = 0x4, scoped, tag = 'scoped memory for tpu_custom_call.1']
    #allocation6 [shape = 'u8[512]{0}', space=smem, size = 0x200, scoped, tag = 'input window, operand 7, single buffered']
    #allocation7 [shape = 'u8[1024]{0}', space=vmem, size = 0x400, scoped, tag = 'output window, operand 0, single buffered']
    %13 = vsyncpa [#allocation3], 0
    %14 = vsyncpa [#allocation5], 0
    %15 = vsyncpa [#allocation4], 0
    // Predicated region
    $region2: #{tpu_custom_call.1} parent=1 // pred_check
      _
    $region3: #{tpu_custom_call.1} parent=1 // pred_check_branch
      %17 = sbr.rel (0) target = $region5
    $region4: #{tpu_custom_call.1} parent=1 // pred_region
      _
    $region5: #{tpu_custom_call.1} parent=1 // pred_fallthru
      _
    // Predicated region
    $region6: #{tpu_custom_call.1} parent=1 // pred_check
      _
    $region7: #{tpu_custom_call.1} parent=1 // pred_check_branch
      %19 = sbr.rel (0) target = $region9
    $region8: #{tpu_custom_call.1} parent=1 // pred_region
      _
    $region9: #{tpu_custom_call.1} parent=1 // pred_fallthru
      _
    // Predicated region
    $region10: #{tpu_custom_call.1} parent=1 // pred_check
      _
    $region11: #{tpu_custom_call.1} parent=1 // pred_check_branch
      %21 = sbr.rel (0) target = $region13
    $region12: #{tpu_custom_call.1} parent=1 // pred_region
      _
    $region13: #{tpu_custom_call.1} parent=1 // pred_fallthru
      _
    // Predicated region
    $region14: #{tpu_custom_call.1} parent=1 // pred_check
      _
    $region15: #{tpu_custom_call.1} parent=1 // pred_check_branch
      %23 = sbr.rel (0) target = $region17
    $region16: #{tpu_custom_call.1} parent=1 // pred_region
      _
    $region17: #{tpu_custom_call.1} parent=1 // pred_fallthru
      _
    // Predicated region
    $region18: #{tpu_custom_call.1} parent=1 // pred_check
      _
    $region19: #{tpu_custom_call.1} parent=1 // pred_check_branch
      %25 = sbr.rel (0) target = $region21
    $region20: #{tpu_custom_call.1} parent=1 // pred_region
      _
    $region21: #{tpu_custom_call.1} parent=1 // pred_fallthru
      _
    // Predicated region
    $region22: #{tpu_custom_call.1} parent=1 // pred_check
      _
    $region23: #{tpu_custom_call.1} parent=1 // pred_check_branch
      %27 = sbr.rel (0) target = $region25
    $region24: #{tpu_custom_call.1} parent=1 // pred_region
      %s29 = ssub.s32 1024, 1024
      %30 = vsyncadd [#allocation3], %s29
      %s31 = sshll.u32 [#allocation2], 4
      %s32 = int_to_ptr.vmem [resolvable:$true] %s31
      %37 = dma.hbm_to_vmem [thread:$0]  %s5, 1024, %s32, [#allocation3], 64, 64, 4
    $region25: #{tpu_custom_call.1} parent=1 // pred_fallthru
      _
    // Predicated region
    $region26: #{tpu_custom_call.1} parent=1 // pred_check
      _
    $region27: #{tpu_custom_call.1} parent=1 // pred_check_branch
      %39 = sbr.rel (0) target = $region29
    $region28: #{tpu_custom_call.1} parent=1 // pred_region
      _
    $region29: #{tpu_custom_call.1} parent=1 // pred_fallthru
      _
    // Predicated region
    $region30: #{tpu_custom_call.1} parent=1 // pred_check
      _
    $region31: #{tpu_custom_call.1} parent=1 // pred_check_branch
      %41 = sbr.rel (0) target = $region33
    $region32: #{tpu_custom_call.1} parent=1 // pred_region
      %s43 = ssub.s32 16, 16
      %44 = vsyncadd [#allocation5], %s43
      %s46 = sshll.u32 %s7, 4
      %s47 = int_to_ptr.vmem [resolvable:$true] %s46
      %49 = dma.vmem_to_smem %s47, 16, [#allocation6], [#allocation5]
    $region33: #{tpu_custom_call.1} parent=1 // pred_fallthru
      _
    // Predicated region
    $region34: #{tpu_custom_call.1} parent=1 // pred_check
      _
    $region35: #{tpu_custom_call.1} parent=1 // pred_check_branch
      %51 = sbr.rel (0) target = $region37
    $region36: #{tpu_custom_call.1} parent=1 // pred_region
      %52 = dma.done [#allocation3], 1024
    $region37: #{tpu_custom_call.1} parent=1 // pred_fallthru
      _
    // Predicated region
    $region38: #{tpu_custom_call.1} parent=1 // pred_check
      _
    $region39: #{tpu_custom_call.1} parent=1 // pred_check_branch
      %54 = sbr.rel (0) target = $region41
    $region40: #{tpu_custom_call.1} parent=1 // pred_region
      %55 = dma.done [#allocation5], 16
    $region41: #{tpu_custom_call.1} parent=1 // pred_fallthru
      _
    %56 = sfence
    %s58 = sld [smem:[#allocation6]]
    %s59 = sld [smem:[#allocation6 + $0x1]]
    %v60 = vld [vmem:[%s0] sm:$0xf]
    %v61 = vld [vmem:[%s0 + $0x4] sm:$0xf]
    %v62 = vld [vmem:[#allocation2] sm:$0xf]
    %v63 = vld [vmem:[#allocation2 + $0x4] sm:$0xf]
    %v64 = vld [vmem:[#allocation2 + $0x8] sm:$0xf]
    %v65 = vld [vmem:[#allocation2 + $0xc] sm:$0xf]
    %v66 = vld [vmem:[#allocation2 + $0x10] sm:$0xf]
    %v67 = vld [vmem:[#allocation2 + $0x14] sm:$0xf]
    %v68 = vld [vmem:[#allocation2 + $0x18] sm:$0xf]
    %v69 = vld [vmem:[#allocation2 + $0x1c] sm:$0xf]
    %v70 = vld [vmem:[#allocation2 + $0x20] sm:$0xf]
    %v71 = vld [vmem:[#allocation2 + $0x24] sm:$0xf]
    %v72 = vld [vmem:[#allocation2 + $0x28] sm:$0xf]
    %v73 = vld [vmem:[#allocation2 + $0x2c] sm:$0xf]
    %v74 = vld [vmem:[#allocation2 + $0x30] sm:$0xf]
    %v75 = vld [vmem:[#allocation2 + $0x34] sm:$0xf]
    %v76 = vld [vmem:[#allocation2 + $0x38] sm:$0xf]
    %v77 = vld [vmem:[#allocation2 + $0x3c] sm:$0xf]
    %v78 = vld [vmem:[%s1] sm:$0x3]
    %v81 = vunpack.c.l.b16 %v60
    %v82 = vunpack.c.l.b16 %v61
    %v83 = vpack.c.b16 %v82, %v81
    %v101 = vunpack.c.l.b16 %v62
    %v102 = vunpack.c.l.b16 %v63
    %v103 = vunpack.c.l.b16 %v64
    %v104 = vunpack.c.l.b16 %v65
    %v105 = vunpack.c.l.b16 %v66
    %v106 = vunpack.c.l.b16 %v67
    %v107 = vunpack.c.l.b16 %v68
    %v108 = vunpack.c.l.b16 %v69
    %v109 = vunpack.c.l.b16 %v70
    %v110 = vunpack.c.l.b16 %v71
    %v111 = vunpack.c.l.b16 %v72
    %v112 = vunpack.c.l.b16 %v73
    %v113 = vunpack.c.l.b16 %v74
    %v114 = vunpack.c.l.b16 %v75
    %v115 = vunpack.c.l.b16 %v76
    %v116 = vunpack.c.l.b16 %v77
    %v117 = vpack.c.b16 %v102, %v101
    %v118 = vpack.c.b16 %v104, %v103
    %v119 = vpack.c.b16 %v106, %v105
    %v120 = vpack.c.b16 %v108, %v107
    %v121 = vpack.c.b16 %v110, %v109
    %v122 = vpack.c.b16 %v112, %v111
    %v123 = vpack.c.b16 %v114, %v113
    %v124 = vpack.c.b16 %v116, %v115
    %133 = vmatprep.subr.bf16.mxu0 0
    %134 = vmatpush1.bf16.xpose.msra.mxu0 %v124
    %135 = vmatprep.subr.bf16.mxu0 0
    %136 = vmatpush1.bf16.xpose.msra.mxu0 %v123
    %137 = vmatprep.subr.bf16.mxu0 0
    %138 = vmatpush1.bf16.xpose.msra.mxu0 %v122
    %139 = vmatprep.subr.bf16.mxu0 0
    %140 = vmatpush1.bf16.xpose.msra.mxu0 %v121
    %141 = vmatprep.subr.bf16.mxu0 0
    %142 = vmatpush1.bf16.xpose.msra.mxu0 %v120
    %143 = vmatprep.subr.bf16.mxu0 0
    %144 = vmatpush1.bf16.xpose.msra.mxu0 %v119
    %145 = vmatprep.subr.bf16.mxu0 0
    %146 = vmatpush1.bf16.xpose.msra.mxu0 %v118
    %147 = vmatprep.subr.bf16.mxu0 0
    %148 = vmatpush1.bf16.xpose.msra.mxu0 %v117
    %149 = vmatprep.subr.bf16.mxu0 0
    %150 = vmatpush2.bf16.xpose.msra.mxu0 0
    %151 = vmatprep.subr.bf16.mxu0 0
    %152 = vmatpush2.bf16.xpose.msra.mxu0 0
    %153 = vmatprep.subr.bf16.mxu0 0
    %154 = vmatpush2.bf16.xpose.msra.mxu0 0
    %155 = vmatprep.subr.bf16.mxu0 0
    %156 = vmatpush2.bf16.xpose.msra.mxu0 0
    %157 = vmatprep.subr.bf16.mxu0 0
    %158 = vmatpush2.bf16.xpose.msra.mxu0 0
    %159 = vmatprep.subr.bf16.mxu0 0
    %160 = vmatpush2.bf16.xpose.msra.mxu0 0
    %161 = vmatprep.subr.bf16.mxu0 0
    %162 = vmatpush2.bf16.xpose.msra.mxu0 0
    %163 = vmatprep.subr.bf16.mxu0 0
    %164 = vmatpush2.bf16.xpose.msra.mxu0 0
    %165 = vmatprep.mubr.bf16.mxu0 0
    %166 = vmatmul.mubr.bf16.gmra.mxu0 %v83
    %v167 = vpop.f32.mrf.mxu0
    %v168 = vadd.f32 0.0, %v167
    %v169 = vpop.f32.mrf.mxu0
    %v170 = vpop.f32.mrf.mxu0
    %v171 = vadd.f32 0.0, %v170
    %v172 = vpop.f32.mrf.mxu0
    %173 = vdwg.mxu0
    %v174 = vlaneseq
    %v175 = vshrl.u32 %v174, 7
    %v176 = vsub.s32 0, %v175
    %v177 = vrot.slane %v78, %v176
    %179 = vbcast.lane.b32.xlu0 %v177, 256
    %v180 = vpop.permute.xlu0 %179
    %v181 = vlaneseq
    %v182 = vshrl.u32 %v181, 7
    %v183 = vsub.s32 1, %v182
    %v184 = vrot.slane %v78, %v183
    %186 = vbcast.lane.b32.xlu0 %v184, 256
    %v187 = vpop.permute.xlu0 %186
    %v188 = vsub.f32 %v180, 1.0
    %v189 = vsub.f32 %v187, 1.0
    %v190 = vmul.f32 %v188, 1e+30
    %v191 = vmul.f32 %v189, 1e+30
    %v192 = vadd.f32 %v168, %v190
    %v193 = vadd.f32 %v171, %v191
    %v194 = vrot.slane %v192, 4
    %v195 = vmax.f32 %v192, %v194
    %v196 = vrot.slane %v195, 2
    %v197 = vmax.f32 %v195, %v196
    %v198 = vrot.slane %v197, 1
    %v199 = vmax.f32 %v197, %v198
    %v200 = vrot.slane %v193, 4
    %v201 = vmax.f32 %v193, %v200
    %v202 = vrot.slane %v201, 2
    %v203 = vmax.f32 %v201, %v202
    %v204 = vrot.slane %v203, 1
    %v205 = vmax.f32 %v203, %v204
    %v206 = vsub.f32 %v192, %v199
    %v207 = vsub.f32 %v193, %v205
    %v208 = vmul.f32 %v206, 1.442695
    %v209 = vpow.pop %v208
    %v210 = vmul.f32 %v207, 1.442695
    %v211 = vpow.pop %v210
    %v212 = vrot.slane %v209, 4
    %v213 = vadd.f32 %v209, %v212
    %v214 = vrot.slane %v213, 2
    %v215 = vadd.f32 %v213, %v214
    %v216 = vrot.slane %v215, 1
    %v217 = vadd.f32 %v215, %v216
    %v218 = vrot.slane %v211, 4
    %v219 = vadd.f32 %v211, %v218
    %v220 = vrot.slane %v219, 2
    %v221 = vadd.f32 %v219, %v220
    %v222 = vrot.slane %v221, 1
    %v223 = vadd.f32 %v221, %v222
    %v224 = vrcp.pop %v217
    %v225 = vrcp.pop %v223
    %v226 = vmul.f32 %v209, %v224
    %v227 = vmul.f32 %v211, %v225
    %v228 = vld [vmem:[%s6] sm:$0x1]
    %v229 = vunpack.c.l.bf16 %v228
    %v230 = vunpack.c.l.bf16 %v60
    %v231 = vunpack.c.l.bf16 %v61
    %v232 = vlaneseq
    %v233 = vshrl.u32 %v232, 7
    %v234 = vsub.s32 0, %v233
    %v235 = vrot.slane %v229, %v234
    %v236 = vmul.f32 %v230, %v235
    %v237 = vmul.f32 %v231, %v235
    %238 = vadd.xlane.f32.xlu0 %v236
    %v239 = vpop.xlane.xlu0 %238
    %240 = vadd.xlane.f32.xlu0 %v237
    %v241 = vpop.xlane.xlu0 %240
    %v242 = vmul.f32 %v226, %v239
    %v243 = vmul.f32 %v227, %v241
    %v244 = vrot.slane %v242, 4
    %v245 = vadd.f32 %v242, %v244
    %v246 = vrot.slane %v245, 2
    %v247 = vadd.f32 %v245, %v246
    %v248 = vrot.slane %v247, 1
    %v249 = vadd.f32 %v247, %v248
    %v250 = vrot.slane %v243, 4
    %v251 = vadd.f32 %v243, %v250
    %v252 = vrot.slane %v251, 2
    %v253 = vadd.f32 %v251, %v252
    %v254 = vrot.slane %v253, 1
    %v255 = vadd.f32 %v253, %v254
    %v256 = vstv %s58
    %v257 = vadd.f32 %v249, %v256
    %v258 = vadd.f32 %v255, %v256
    %v259 = vld [vmem:[%s2] sm:$0x7]
    %v260 = vld [vmem:[%s2 + $0x4] sm:$0x7]
    %v261 = vunpack.c.l.bf16 %v259
    %v262 = vunpack.c.l.bf16 %v260
    %v263 = vld [vmem:[%s4] sm:$0x1]
    %v264 = vunpack.c.l.bf16 %v263
    %v265 = vld [vmem:[%s3] sm:$0x3]
    %v268 = vunpack.c.l.s4 1966171168
    %v269 = vunpack.c.0.s8 %v268
    %v270 = vlaneseq
    %v271 = vshrl.u32 %v270, 7
    %v272 = vsub.s32 %v269, %v271
    %v273 = vrot.slane %v264, %v272
    %v274 = vcombine.high %v273, %v273
    %v275 = vlaneseq
    %v276 = vshrl.u32 %v275, 7
    %v277 = vsub.s32 0, %v276
    %v278 = vrot.slane %v273, %v277
    %v279 = vlaneseq
    %v280 = vshrl.u32 %v279, 7
    %v281 = vsub.s32 0, %v280
    %v282 = vrot.slane %v274, %v281
    %v285 = vmul.f32 %v278, %v261
    %v286 = vmul.f32 %v282, %v262
    %vm287 = vcmask 1045504
    %v288 = vsel %vm287, %v285, 0.0
    %289 = vadd.xlane.f32.xlu0 %v288
    %v290 = vpop.xlane.xlu0 %289
    %v291 = vsel %vm287, %v286, 0.0
    %292 = vadd.xlane.f32.xlu0 %v291
    %v293 = vpop.xlane.xlu0 %292
    %v294 = vsub.f32 %v265, 1.0
    %v295 = vmul.f32 %v294, 1e+30
    %v297 = vlaneseq
    %v298 = vshrl.u32 %v297, 7
    %v299 = vsub.s32 0, %v298
    %v300 = vrot.slane %v295, %v299
    %302 = vbcast.lane.b32.xlu0 %v300, 256
    %v303 = vpop.permute.xlu0 %302
    %v304 = vlaneseq
    %v305 = vshrl.u32 %v304, 7
    %v306 = vsub.s32 1, %v305
    %v307 = vrot.slane %v295, %v306
    %309 = vbcast.lane.b32.xlu0 %v307, 256
    %v310 = vpop.permute.xlu0 %309
    %v313 = vadd.f32 %v290, %v303
    %v314 = vadd.f32 %v293, %v310
    %317 = vset.pattern.permute.xlu0 0
    %318 = vperm.xlu0 %317, %v313
    %v319 = vpop.permute.xlu0 %318
    %320 = vset.pattern.permute.xlu0 0
    %321 = vperm.xlu0 %320, %v314
    %v322 = vpop.permute.xlu0 %321
    %v323 = vlaneseq
    %v324 = vand.u32 %v323, 127
    %v325 = vlaneseq
    %v326 = vshrl.u32 %v325, 7
    %v327 = vsub.s32 %v324, %v326
    %v328 = vrot.slane %v319, %v327
    %v329 = vlaneseq
    %v330 = vshrl.u32 %v329, 7
    %v331 = vsub.s32 %v324, %v330
    %v332 = vrot.slane %v322, %v331
    %vm333 = vcmask 1041409
    %v334 = vsel %vm333, %v332, %v328
    %vm336 = vcmask 41984
    %v337 = vsel %vm336, %v334, -inf
    %338 = vmax.xlane.f32.xlu0 %v337
    %v339 = vpop.xlane.xlu0 %338
    %v341 = vlaneseq
    %v342 = vshrl.u32 %v341, 7
    %v343 = vsub.s32 0, %v342
    %v344 = vrot.slane %v339, %v343
    %v345 = vlaneseq
    %v346 = vshrl.u32 %v345, 7
    %v347 = vsub.s32 1, %v346
    %v348 = vrot.slane %v339, %v347
    %v351 = vsub.f32 %v313, %v344
    %v352 = vsub.f32 %v314, %v348
    %v353 = vmul.f32 %v351, 1.442695
    %v354 = vpow.pop %v353
    %v355 = vmul.f32 %v352, 1.442695
    %v356 = vpow.pop %v355
    %359 = vset.pattern.permute.xlu0 0
    %360 = vperm.xlu0 %359, %v354
    %v361 = vpop.permute.xlu0 %360
    %362 = vset.pattern.permute.xlu0 0
    %363 = vperm.xlu0 %362, %v356
    %v364 = vpop.permute.xlu0 %363
    %v365 = vlaneseq
    %v366 = vshrl.u32 %v365, 7
    %v367 = vsub.s32 %v324, %v366
    %v368 = vrot.slane %v361, %v367
    %v369 = vlaneseq
    %v370 = vshrl.u32 %v369, 7
    %v371 = vsub.s32 %v324, %v370
    %v372 = vrot.slane %v364, %v371
    %v373 = vsel %vm333, %v372, %v368
    %v375 = vsel %vm336, %v373, 0.0
    %376 = vadd.xlane.f32.xlu0 %v375
    %v377 = vpop.xlane.xlu0 %376
    %v378 = vrcp.pop %v377
    %v380 = vlaneseq
    %v381 = vshrl.u32 %v380, 7
    %v382 = vsub.s32 0, %v381
    %v383 = vrot.slane %v378, %v382
    %v384 = vlaneseq
    %v385 = vshrl.u32 %v384, 7
    %v386 = vsub.s32 1, %v385
    %v387 = vrot.slane %v378, %v386
    %v390 = vmul.f32 %v354, %v383
    %v391 = vmul.f32 %v356, %v387
    %393 = vset.pattern.permute.xlu0 0
    %394 = vperm.xlu0 %393, %v390
    %v395 = vpop.permute.xlu0 %394
    %398 = vset.pattern.permute.xlu0 0
    %399 = vperm.xlu0 %398, %v391
    %v400 = vpop.permute.xlu0 %399
    %v402 = vmul.f32 %v395, %v261
    %v403 = vmul.f32 %v400, %v262
    %v404 = vsel %vm287, %v402, 0.0
    %v405 = vrot.slane %v404, 4
    %v406 = vadd.f32 %v404, %v405
    %v407 = vrot.slane %v406, 2
    %v408 = vadd.f32 %v406, %v407
    %v409 = vrot.slane %v408, 1
    %v410 = vadd.f32 %v408, %v409
    %v411 = vsel %vm287, %v403, 0.0
    %v412 = vrot.slane %v411, 4
    %v413 = vadd.f32 %v411, %v412
    %v414 = vrot.slane %v413, 2
    %v415 = vadd.f32 %v413, %v414
    %v416 = vrot.slane %v415, 1
    %v417 = vadd.f32 %v415, %v416
    %v418 = vunpack.c.l.bf16 %v62
    %v419 = vunpack.c.l.bf16 %v63
    %v420 = vunpack.c.l.bf16 %v64
    %v421 = vunpack.c.l.bf16 %v65
    %v422 = vunpack.c.l.bf16 %v66
    %v423 = vunpack.c.l.bf16 %v67
    %v424 = vunpack.c.l.bf16 %v68
    %v425 = vunpack.c.l.bf16 %v69
    %v426 = vunpack.c.l.bf16 %v70
    %v427 = vunpack.c.l.bf16 %v71
    %v428 = vunpack.c.l.bf16 %v72
    %v429 = vunpack.c.l.bf16 %v73
    %v430 = vunpack.c.l.bf16 %v74
    %v431 = vunpack.c.l.bf16 %v75
    %v432 = vunpack.c.l.bf16 %v76
    %v433 = vunpack.c.l.bf16 %v77
    %v436 = vsel %vm333, %v417, %v410
    %438 = vmatprep.subr.mxu0 0.0
    %439 = vmatpush1.xpose.msra.mxu0 %v433
    %440 = vmatprep.subr.mxu0 0.0
    %441 = vmatpush1.xpose.msra.mxu0 %v432
    %442 = vmatprep.subr.mxu0 0.0
    %443 = vmatpush1.xpose.msra.mxu0 %v431
    %444 = vmatprep.subr.mxu0 0.0
    %445 = vmatpush1.xpose.msra.mxu0 %v430
    %446 = vmatprep.subr.mxu0 0.0
    %447 = vmatpush1.xpose.msra.mxu0 %v429
    %448 = vmatprep.subr.mxu0 0.0
    %449 = vmatpush1.xpose.msra.mxu0 %v428
    %450 = vmatprep.subr.mxu0 0.0
    %451 = vmatpush1.xpose.msra.mxu0 %v427
    %452 = vmatprep.subr.mxu0 0.0
    %453 = vmatpush1.xpose.msra.mxu0 %v426
    %454 = vmatprep.subr.mxu0 0.0
    %455 = vmatpush1.xpose.msra.mxu0 %v425
    %456 = vmatprep.subr.mxu0 0.0
    %457 = vmatpush1.xpose.msra.mxu0 %v424
    %458 = vmatprep.subr.mxu0 0.0
    %459 = vmatpush1.xpose.msra.mxu0 %v423
    %460 = vmatprep.subr.mxu0 0.0
    %461 = vmatpush1.xpose.msra.mxu0 %v422
    %462 = vmatprep.subr.mxu0 0.0
    %463 = vmatpush1.xpose.msra.mxu0 %v421
    %464 = vmatprep.subr.mxu0 0.0
    %465 = vmatpush1.xpose.msra.mxu0 %v420
    %466 = vmatprep.subr.mxu0 0.0
    %467 = vmatpush1.xpose.msra.mxu0 %v419
    %468 = vmatprep.subr.mxu0 0.0
    %469 = vmatpush1.xpose.msra.mxu0 %v418
    %470 = vmatprep.subr.mxu0 0.0
    %471 = vmatpush2.xpose.msra.mxu0 0.0
    %472 = vmatprep.subr.mxu0 0.0
    %473 = vmatpush2.xpose.msra.mxu0 0.0
    %474 = vmatprep.subr.mxu0 0.0
    %475 = vmatpush2.xpose.msra.mxu0 0.0
    %476 = vmatprep.subr.mxu0 0.0
    %477 = vmatpush2.xpose.msra.mxu0 0.0
    %478 = vmatprep.subr.mxu0 0.0
    %479 = vmatpush2.xpose.msra.mxu0 0.0
    %480 = vmatprep.subr.mxu0 0.0
    %481 = vmatpush2.xpose.msra.mxu0 0.0
    %482 = vmatprep.subr.mxu0 0.0
    %483 = vmatpush2.xpose.msra.mxu0 0.0
    %484 = vmatprep.subr.mxu0 0.0
    %485 = vmatpush2.xpose.msra.mxu0 0.0
    %486 = vmatprep.subr.mxu0 0.0
    %487 = vmatpush2.xpose.msra.mxu0 0.0
    %488 = vmatprep.subr.mxu0 0.0
    %489 = vmatpush2.xpose.msra.mxu0 0.0
    %490 = vmatprep.subr.mxu0 0.0
    %491 = vmatpush2.xpose.msra.mxu0 0.0
    %492 = vmatprep.subr.mxu0 0.0
    %493 = vmatpush2.xpose.msra.mxu0 0.0
    %494 = vmatprep.subr.mxu0 0.0
    %495 = vmatpush2.xpose.msra.mxu0 0.0
    %496 = vmatprep.subr.mxu0 0.0
    %497 = vmatpush2.xpose.msra.mxu0 0.0
    %498 = vmatprep.subr.mxu0 0.0
    %499 = vmatpush2.xpose.msra.mxu0 0.0
    %500 = vmatprep.subr.mxu0 0.0
    %501 = vmatpush2.xpose.msra.mxu0 0.0
    %502 = vmatprep.mubr.f32.mxu0 0.0
    %503 = vmatmul.mubr.f32.gmra.mxu0 %v436
    %v504 = vpop.f32.mrf.mxu0
    %v505 = vadd.f32 0.0, %v504
    %v506 = vpop.f32.mrf.mxu0
    %507 = vdwg.mxu0
    %v508 = vstv %s59
    %v509 = vmul.f32 %v508, %v505
    %v511 = vrot.slane %v509, 1
    %v514 = vadd.f32 %v257, %v509
    %v515 = vadd.f32 %v258, %v511
    %v516 = vsub.f32 0.0, %v514
    %v517 = vsub.f32 0.0, %v515
    %v518 = vmul.f32 %v516, 1.442695
    %v519 = vpow.pop %v518
    %v520 = vmul.f32 %v517, 1.442695
    %v521 = vpow.pop %v520
    %v522 = vadd.f32 %v519, 1.0
    %v523 = vadd.f32 %v521, 1.0
    %v524 = vrcp.pop %v522
    %v525 = vrcp.pop %v523
    %v528 = vrot.slane %v525, 7
    %v529 = vsel %vm333, %v528, %v524
    %531 = vst [vmem:[#allocation7] sm:$0x3] %v529
    // Predicated region
    $region42: #{tpu_custom_call.1} parent=1 // pred_check
      _
    $region43: #{tpu_custom_call.1} parent=1 // pred_check_branch
      %533 = sbr.rel (0) target = $region45
    $region44: #{tpu_custom_call.1} parent=1 // pred_region
      %s535 = ssub.s32 32, 32
      %536 = vsyncadd [#allocation4], %s535
      %s538 = sshll.u32 [#allocation7], 4
      %s539 = int_to_ptr.vmem [resolvable:$true] %s538
      %541 = dma.vmem_to_hbm [thread:$0]  %s539, 32, %s8, [#allocation4]
    $region45: #{tpu_custom_call.1} parent=1 // pred_fallthru
      _
    // Predicated region
    $region46: #{tpu_custom_call.1} parent=1 // pred_check
      _
    $region47: #{tpu_custom_call.1} parent=1 // pred_check_branch
      %543 = sbr.rel (0) target = $region49
    $region48: #{tpu_custom_call.1} parent=1 // pred_region
      %544 = dma.done [#allocation4], 32
    $region49: #{tpu_custom_call.1} parent=1 // pred_fallthru
      _
    %545 = vsyncpa [#allocation3], 1
    %546 = vsyncpa [#allocation4], 1
    %547 = vsyncpa [#allocation5], 1

</llo_original>
